<compile_context>
chip_gen: v7x
topology: tpu7x:2x2x1
jax: 0.10.0
libtpu: 0.0.40
codegen_flags: <defaults>
</compile_context>

<pallas_src>
import functools

import jax
import jax.numpy as jnp
from jax.experimental import pallas as pl
from jax.experimental.pallas import tpu as pltpu

HIDDEN = 32


def mlp_kernel(x_ref,
               w1_ref, b1_ref,
               w2_ref, b2_ref,
               w3_ref, b3_ref,
               w4_ref, b4_ref,
               o_ref):
    # Transposed layout: features on sublanes, batch on the 128-lane axis.
    # x_ref: (input_num, tile), w*: (out, in), b*: (out, 1), o_ref: (out, tile)
    x = x_ref[...]
    h = jnp.tanh(
        jnp.dot(w1_ref[...], x, preferred_element_type=jnp.float32)
        + b1_ref[...])
    h = jnp.tanh(
        jnp.dot(w2_ref[...], h, preferred_element_type=jnp.float32)
        + b2_ref[...])
    h = jnp.tanh(
        jnp.dot(w3_ref[...], h, preferred_element_type=jnp.float32)
        + b3_ref[...])
    out = (jnp.dot(w4_ref[...], h, preferred_element_type=jnp.float32)
           + b4_ref[...])
    o_ref[...] = out.astype(o_ref.dtype)


def _round_up(v, m):
    return ((v + m - 1) // m) * m


@functools.lru_cache(maxsize=1)
def _num_tensorcores():
    """Best-effort TensorCores-per-chip detection (v7x has 2, v5e/v6e have 1)."""
    try:
        kind = jax.devices()[0].device_kind.lower()
        return 2 if "v7" in kind else 1
    except Exception:  # pragma: no cover - conservative fallback
        return 1


def _choose_tile(n, requested_tile):
    """Pick a lane-axis batch tile.

    - multiple of 128 (batch now sits on the 128-lane axis),
    - never (much) larger than the batch itself,
    - on multi-TC chips (v7x) split into ~2 balanced steps when the batch
      allows, so the `parallel` grid axis can shard across both cores;
      on single-TC v5e/v6e keep one big step.
    """
    tile = max(128, (int(requested_tile) // 128) * 128)
    tile = min(tile, _round_up(n, 128))
    if _num_tensorcores() >= 2 and n > 128:
        tile = min(tile, _round_up(pl.cdiv(n, 2), 128))
    return tile


@functools.partial(jax.jit, static_argnames=("tile_n",))
def mlp_forward(x, params, tile_n=4096):
    """x: (N, input_num) float32.  params: PyTorch-layout weights/biases."""
    n, input_num = x.shape
    output_num = params["w4"].shape[0]

    tile = _choose_tile(n, tile_n)
    grid = (pl.cdiv(n, tile),)

    # Layout plumbing only: present a lane-dense (features x batch) slab.
    xt = x.T  # (input_num, n)

    def full_spec(shape):
        # Whole (small) parameter is VMEM-resident for every grid step
        # (constant block index -> no re-DMA).
        return pl.BlockSpec(shape, lambda i: (0,) * len(shape))

    out_t = pl.pallas_call(
        mlp_kernel,
        out_shape=jax.ShapeDtypeStruct((output_num, n), x.dtype),
        grid_spec=pl.GridSpec(
            grid=grid,
            in_specs=[
                pl.BlockSpec((input_num, tile), lambda i: (0, i)),
                full_spec(params["w1"].shape), full_spec(params["b1"].shape),
                full_spec(params["w2"].shape), full_spec(params["b2"].shape),
                full_spec(params["w3"].shape), full_spec(params["b3"].shape),
                full_spec(params["w4"].shape), full_spec(params["b4"].shape),
            ],
            out_specs=pl.BlockSpec((output_num, tile), lambda i: (0, i)),
        ),
        compiler_params=pltpu.CompilerParams(
            dimension_semantics=("parallel",)),
    )(xt,
      params["w1"], params["b1"],
      params["w2"], params["b2"],
      params["w3"], params["b3"],
      params["w4"], params["b4"])

    return out_t.T  # (n, output_num)


def init_params(key, input_num, output_num):
    """Deterministic init mimicking torch.nn.Linear (uniform +/- 1/sqrt(fan_in)).

    Weights stored (out_features, in_features) -- PyTorch's native layout;
    biases stored (out_features, 1) so they broadcast over the lane axis.
    """
    dims = [(input_num, HIDDEN), (HIDDEN, HIDDEN),
            (HIDDEN, HIDDEN), (HIDDEN, output_num)]
    params = {}
    keys = jax.random.split(key, 2 * len(dims))
    for idx, (fan_in, fan_out) in enumerate(dims):
        bound = 1.0 / jnp.sqrt(float(fan_in))
        w = jax.random.uniform(keys[2 * idx], (fan_out, fan_in),
                               minval=-bound, maxval=bound,
                               dtype=jnp.float32)
        b = jax.random.uniform(keys[2 * idx + 1], (fan_out, 1),
                               minval=-bound, maxval=bound,
                               dtype=jnp.float32)
        params[f"w{idx + 1}"] = w
        params[f"b{idx + 1}"] = b
    return params


def mlp_reference(x, params):
    h = jnp.tanh(x @ params["w1"].T + params["b1"].T)
    h = jnp.tanh(h @ params["w2"].T + params["b2"].T)
    h = jnp.tanh(h @ params["w3"].T + params["b3"].T)
    return h @ params["w4"].T + params["b4"].T


if __name__ == "__main__":
    key = jax.random.PRNGKey(0)
    k_param, k_x = jax.random.split(key)

    input_num, output_num = 4, 2   # e.g. PINN with (x, y, z, t) -> (u, p)
    batch = 300                    # not a multiple of 128: exercises the
                                   # masked boundary block (no pad/slice)

    params = init_params(k_param, input_num, output_num)
    x = jax.random.normal(k_x, (batch, input_num), dtype=jnp.float32)

    out = mlp_forward(x, params, tile_n=4096)
    out = jax.block_until_ready(out)

    ref = mlp_reference(x, params)
    assert out.shape == (batch, output_num)
    assert jnp.allclose(out, ref, atol=1e-5, rtol=1e-5)

    print("KERNEL_OK")
</pallas_src>

<mosaic_0001>
module attributes {stable_mosaic.version = 11 : i64} {
  func.func @mlp_kernel(%arg0: i32, %arg1: memref<4x384xf32, #tpu.memory_space<vmem>>, %arg2: memref<32x4xf32, #tpu.memory_space<vmem>>, %arg3: memref<32x1xf32, #tpu.memory_space<vmem>>, %arg4: memref<32x32xf32, #tpu.memory_space<vmem>>, %arg5: memref<32x1xf32, #tpu.memory_space<vmem>>, %arg6: memref<32x32xf32, #tpu.memory_space<vmem>>, %arg7: memref<32x1xf32, #tpu.memory_space<vmem>>, %arg8: memref<2x32xf32, #tpu.memory_space<vmem>>, %arg9: memref<2x1xf32, #tpu.memory_space<vmem>>, %arg10: memref<2x384xf32, #tpu.memory_space<vmem>>) attributes {dimension_semantics = [#tpu.dimension_semantics<parallel>], iteration_bounds = array<i64: 1>, scalar_prefetch = 0 : i64, scratch_operands = 0 : i64, tpu.core_type = #tpu.core_type<tc>, window_params = [{transform_indices = @transform_0, window_bounds = array<i64: 4, 384>}, {pipeline_mode = #tpu.pipeline_mode<synchronous>, transform_indices = @transform_1, window_bounds = array<i64: 32, 4>}, {pipeline_mode = #tpu.pipeline_mode<synchronous>, transform_indices = @transform_2, window_bounds = array<i64: 32, 1>}, {pipeline_mode = #tpu.pipeline_mode<synchronous>, transform_indices = @transform_3, window_bounds = array<i64: 32, 32>}, {pipeline_mode = #tpu.pipeline_mode<synchronous>, transform_indices = @transform_4, window_bounds = array<i64: 32, 1>}, {pipeline_mode = #tpu.pipeline_mode<synchronous>, transform_indices = @transform_5, window_bounds = array<i64: 32, 32>}, {pipeline_mode = #tpu.pipeline_mode<synchronous>, transform_indices = @transform_6, window_bounds = array<i64: 32, 1>}, {pipeline_mode = #tpu.pipeline_mode<synchronous>, transform_indices = @transform_7, window_bounds = array<i64: 2, 32>}, {pipeline_mode = #tpu.pipeline_mode<synchronous>, transform_indices = @transform_8, window_bounds = array<i64: 2, 1>}, {transform_indices = @transform_9, window_bounds = array<i64: 2, 384>}]} {
    %c0 = arith.constant 0 : index
    %c0_0 = arith.constant 0 : index
    %0 = vector.load %arg1[%c0, %c0_0] : memref<4x384xf32, #tpu.memory_space<vmem>>, vector<4x384xf32>
    %c0_1 = arith.constant 0 : index
    %c0_2 = arith.constant 0 : index
    %1 = vector.load %arg2[%c0_1, %c0_2] : memref<32x4xf32, #tpu.memory_space<vmem>>, vector<32x4xf32>
    %cst = arith.constant dense<0.000000e+00> : vector<32x384xf32>
    %2 = tpu.matmul %1, %0, %cst {dimension_numbers = #tpu.dot_dimension_numbers<[1], [0], [0], [1], [0, 0, 1, 1], [], []>} : vector<32x4xf32>, vector<4x384xf32>, vector<32x384xf32> -> vector<32x384xf32>
    %c0_3 = arith.constant 0 : index
    %c0_4 = arith.constant 0 : index
    %3 = vector.load %arg3[%c0_3, %c0_4] : memref<32x1xf32, #tpu.memory_space<vmem>>, vector<32x1xf32>
    %4 = vector.broadcast %3 : vector<32x1xf32> to vector<32x384xf32>
    %5 = arith.addf %2, %4 : vector<32x384xf32>
    %6 = math.tanh %5 : vector<32x384xf32>
    %c0_5 = arith.constant 0 : index
    %c0_6 = arith.constant 0 : index
    %7 = vector.load %arg4[%c0_5, %c0_6] : memref<32x32xf32, #tpu.memory_space<vmem>>, vector<32x32xf32>
    %cst_7 = arith.constant dense<0.000000e+00> : vector<32x384xf32>
    %8 = tpu.matmul %7, %6, %cst_7 {dimension_numbers = #tpu.dot_dimension_numbers<[1], [0], [0], [1], [0, 0, 1, 1], [], []>} : vector<32x32xf32>, vector<32x384xf32>, vector<32x384xf32> -> vector<32x384xf32>
    %c0_8 = arith.constant 0 : index
    %c0_9 = arith.constant 0 : index
    %9 = vector.load %arg5[%c0_8, %c0_9] : memref<32x1xf32, #tpu.memory_space<vmem>>, vector<32x1xf32>
    %10 = vector.broadcast %9 : vector<32x1xf32> to vector<32x384xf32>
    %11 = arith.addf %8, %10 : vector<32x384xf32>
    %12 = math.tanh %11 : vector<32x384xf32>
    %c0_10 = arith.constant 0 : index
    %c0_11 = arith.constant 0 : index
    %13 = vector.load %arg6[%c0_10, %c0_11] : memref<32x32xf32, #tpu.memory_space<vmem>>, vector<32x32xf32>
    %cst_12 = arith.constant dense<0.000000e+00> : vector<32x384xf32>
    %14 = tpu.matmul %13, %12, %cst_12 {dimension_numbers = #tpu.dot_dimension_numbers<[1], [0], [0], [1], [0, 0, 1, 1], [], []>} : vector<32x32xf32>, vector<32x384xf32>, vector<32x384xf32> -> vector<32x384xf32>
    %c0_13 = arith.constant 0 : index
    %c0_14 = arith.constant 0 : index
    %15 = vector.load %arg7[%c0_13, %c0_14] : memref<32x1xf32, #tpu.memory_space<vmem>>, vector<32x1xf32>
    %16 = vector.broadcast %15 : vector<32x1xf32> to vector<32x384xf32>
    %17 = arith.addf %14, %16 : vector<32x384xf32>
    %18 = math.tanh %17 : vector<32x384xf32>
    %c0_15 = arith.constant 0 : index
    %c0_16 = arith.constant 0 : index
    %19 = vector.load %arg8[%c0_15, %c0_16] : memref<2x32xf32, #tpu.memory_space<vmem>>, vector<2x32xf32>
    %cst_17 = arith.constant dense<0.000000e+00> : vector<2x384xf32>
    %20 = tpu.matmul %19, %18, %cst_17 {dimension_numbers = #tpu.dot_dimension_numbers<[1], [0], [0], [1], [0, 0, 1, 1], [], []>} : vector<2x32xf32>, vector<32x384xf32>, vector<2x384xf32> -> vector<2x384xf32>
    %c0_18 = arith.constant 0 : index
    %c0_19 = arith.constant 0 : index
    %21 = vector.load %arg9[%c0_18, %c0_19] : memref<2x1xf32, #tpu.memory_space<vmem>>, vector<2x1xf32>
    %22 = vector.broadcast %21 : vector<2x1xf32> to vector<2x384xf32>
    %23 = arith.addf %20, %22 : vector<2x384xf32>
    %c0_20 = arith.constant 0 : index
    %c0_21 = arith.constant 0 : index
    %24 = vector.load %arg10[%c0_20, %c0_21] : memref<2x384xf32, #tpu.memory_space<vmem>>, vector<2x384xf32>
    tpu.vector_store %arg10[%c0_20, %c0_21], %23 {strides = array<i32>} : memref<2x384xf32, #tpu.memory_space<vmem>>, vector<2x384xf32>,
    return
  }
  func.func @transform_0(%arg0: i32) -> (i32, i32) {
    %c0_i32 = arith.constant 0 : i32
    %c0_i32_0 = arith.constant 0 : i32
    return %c0_i32, %arg0 : i32, i32
  }
  func.func @transform_1(%arg0: i32) -> (i32, i32) {
    %c0_i32 = arith.constant 0 : i32
    %c0_i32_0 = arith.constant 0 : i32
    %c0_i32_1 = arith.constant 0 : i32
    return %c0_i32, %c0_i32_0 : i32, i32
  }
  func.func @transform_2(%arg0: i32) -> (i32, i32) {
    %c0_i32 = arith.constant 0 : i32
    %c0_i32_0 = arith.constant 0 : i32
    %c0_i32_1 = arith.constant 0 : i32
    return %c0_i32, %c0_i32_0 : i32, i32
  }
  func.func @transform_3(%arg0: i32) -> (i32, i32) {
    %c0_i32 = arith.constant 0 : i32
    %c0_i32_0 = arith.constant 0 : i32
    %c0_i32_1 = arith.constant 0 : i32
    return %c0_i32, %c0_i32_0 : i32, i32
  }
  func.func @transform_4(%arg0: i32) -> (i32, i32) {
    %c0_i32 = arith.constant 0 : i32
    %c0_i32_0 = arith.constant 0 : i32
    %c0_i32_1 = arith.constant 0 : i32
    return %c0_i32, %c0_i32_0 : i32, i32
  }
  func.func @transform_5(%arg0: i32) -> (i32, i32) {
    %c0_i32 = arith.constant 0 : i32
    %c0_i32_0 = arith.constant 0 : i32
    %c0_i32_1 = arith.constant 0 : i32
    return %c0_i32, %c0_i32_0 : i32, i32
  }
  func.func @transform_6(%arg0: i32) -> (i32, i32) {
    %c0_i32 = arith.constant 0 : i32
    %c0_i32_0 = arith.constant 0 : i32
    %c0_i32_1 = arith.constant 0 : i32
    return %c0_i32, %c0_i32_0 : i32, i32
  }
  func.func @transform_7(%arg0: i32) -> (i32, i32) {
    %c0_i32 = arith.constant 0 : i32
    %c0_i32_0 = arith.constant 0 : i32
    %c0_i32_1 = arith.constant 0 : i32
    return %c0_i32, %c0_i32_0 : i32, i32
  }
  func.func @transform_8(%arg0: i32) -> (i32, i32) {
    %c0_i32 = arith.constant 0 : i32
    %c0_i32_0 = arith.constant 0 : i32
    %c0_i32_1 = arith.constant 0 : i32
    return %c0_i32, %c0_i32_0 : i32, i32
  }
  func.func @transform_9(%arg0: i32) -> (i32, i32) {
    %c0_i32 = arith.constant 0 : i32
    %c0_i32_0 = arith.constant 0 : i32
    return %c0_i32, %arg0 : i32, i32
  }
}

</mosaic_0001>

<llo_original>
// kernel: mlp_forward.1
$region0: #{mlp_forward.1}
  #allocation0 [shape = 'u32[]', space=smem, size = 0x4, offset = 0x4, fixed_abs, tag = 'smem constant byte address 0x4 - core index']
  #allocation1 [shape = 'u32[144,128]{1,0:T(1,128)}', space=vmem, size = 0x12000, scoped, tag = 'internal scratch']
  %s0 = inlined_call_operand.vmem [shape: f32[4,300], index: 0, kind: input, shape index: {}]
  %s1 = inlined_call_operand.vmem [shape: f32[32,4], index: 1, kind: input, shape index: {}]
  %s2 = inlined_call_operand.vmem [shape: f32[32,1], index: 2, kind: input, shape index: {}]
  %s3 = inlined_call_operand.vmem [shape: f32[32,32], index: 3, kind: input, shape index: {}]
  %s4 = inlined_call_operand.vmem [shape: f32[32,1], index: 4, kind: input, shape index: {}]
  %s5 = inlined_call_operand.vmem [shape: f32[32,32], index: 5, kind: input, shape index: {}]
  %s6 = inlined_call_operand.vmem [shape: f32[32,1], index: 6, kind: input, shape index: {}]
  %s7 = inlined_call_operand.vmem [shape: f32[2,32], index: 7, kind: input, shape index: {}]
  %s8 = inlined_call_operand.vmem [shape: f32[2,1], index: 8, kind: input, shape index: {}]
  %s9 = inlined_call_operand.hbm [shape: f32[2,300], index: 9, kind: output, shape index: {}]
  %s10 = sld [smem:[#allocation0]]
  $region46: #{mlp_forward.1} parent=0
    _
  %s12 = ssub.s32 1, %s10
  %s13 = scalar_select 0, %s12, %s10
  $region1: #{mlp_forward.1} parent=0
    #allocation2 [shape = 'u8[3072]{0}', space=vmem, size = 0xc00, scoped, tag = 'output window, operand 0, single buffered']
    #allocation3 [shape = 's32[1]{0}', space=sflag, size = 0x4, scoped, tag = 'scoped memory for mlp_forward.1']
    %14 = vsyncpa [#allocation3], 0
    // Predicated region
    $region2: #{mlp_forward.1} parent=1 // pred_check
      _
    $region3: #{mlp_forward.1} parent=1 // pred_check_branch
      %16 = sbr.rel (0) target = $region5
    $region4: #{mlp_forward.1} parent=1 // pred_region
      _
    $region5: #{mlp_forward.1} parent=1 // pred_fallthru
      _
    // Predicated region
    $region6: #{mlp_forward.1} parent=1 // pred_check
      _
    $region7: #{mlp_forward.1} parent=1 // pred_check_branch
      %18 = sbr.rel (0) target = $region9
    $region8: #{mlp_forward.1} parent=1 // pred_region
      _
    $region9: #{mlp_forward.1} parent=1 // pred_fallthru
      _
    // Predicated region
    $region10: #{mlp_forward.1} parent=1 // pred_check
      _
    $region11: #{mlp_forward.1} parent=1 // pred_check_branch
      %20 = sbr.rel (0) target = $region13
    $region12: #{mlp_forward.1} parent=1 // pred_region
      _
    $region13: #{mlp_forward.1} parent=1 // pred_fallthru
      _
    // Predicated region
    $region14: #{mlp_forward.1} parent=1 // pred_check
      _
    $region15: #{mlp_forward.1} parent=1 // pred_check_branch
      %22 = sbr.rel (0) target = $region17
    $region16: #{mlp_forward.1} parent=1 // pred_region
      _
    $region17: #{mlp_forward.1} parent=1 // pred_fallthru
      _
    // Predicated region
    $region18: #{mlp_forward.1} parent=1 // pred_check
      _
    $region19: #{mlp_forward.1} parent=1 // pred_check_branch
      %24 = sbr.rel (0) target = $region21
    $region20: #{mlp_forward.1} parent=1 // pred_region
      _
    $region21: #{mlp_forward.1} parent=1 // pred_fallthru
      _
    // Predicated region
    $region22: #{mlp_forward.1} parent=1 // pred_check
      _
    $region23: #{mlp_forward.1} parent=1 // pred_check_branch
      %26 = sbr.rel (0) target = $region25
    $region24: #{mlp_forward.1} parent=1 // pred_region
      _
    $region25: #{mlp_forward.1} parent=1 // pred_fallthru
      _
    // Predicated region
    $region26: #{mlp_forward.1} parent=1 // pred_check
      _
    $region27: #{mlp_forward.1} parent=1 // pred_check_branch
      %28 = sbr.rel (0) target = $region29
    $region28: #{mlp_forward.1} parent=1 // pred_region
      _
    $region29: #{mlp_forward.1} parent=1 // pred_fallthru
      _
    // Predicated region
    $region30: #{mlp_forward.1} parent=1 // pred_check
      _
    $region31: #{mlp_forward.1} parent=1 // pred_check_branch
      %30 = sbr.rel (0) target = $region33
    $region32: #{mlp_forward.1} parent=1 // pred_region
      _
    $region33: #{mlp_forward.1} parent=1 // pred_fallthru
      _
    // Predicated region
    $region34: #{mlp_forward.1} parent=1 // pred_check
      _
    $region35: #{mlp_forward.1} parent=1 // pred_check_branch
      %32 = sbr.rel (0) target = $region37
    $region36: #{mlp_forward.1} parent=1 // pred_region
      _
    $region37: #{mlp_forward.1} parent=1 // pred_fallthru
      _
    %v33 = vld [vmem:[%s0] sm:$0xff]
    %v34 = vld [vmem:[%s0 + $0x8] sm:$0xf]
    %v35 = vld [vmem:[%s1] sm:$0xff]
    %v36 = vld [vmem:[%s1 + $0x8] sm:$0xff]
    %v37 = vld [vmem:[%s1 + $0x10] sm:$0xff]
    %v38 = vld [vmem:[%s1 + $0x18] sm:$0xff]
    %v39 = vld [vmem:[%s2] sm:$0xff]
    %v40 = vld [vmem:[%s2 + $0x8] sm:$0xff]
    %v41 = vld [vmem:[%s2 + $0x10] sm:$0xff]
    %v42 = vld [vmem:[%s2 + $0x18] sm:$0xff]
    %44 = vset.pattern.permute.xlu0 0
    %45 = vperm.xlu0 %44, %v39
    %v46 = vpop.permute.xlu0 %45
    %49 = vset.pattern.permute.xlu0 0
    %50 = vperm.xlu0 %49, %v40
    %v51 = vpop.permute.xlu0 %50
    %54 = vset.pattern.permute.xlu0 0
    %55 = vperm.xlu0 %54, %v41
    %v56 = vpop.permute.xlu0 %55
    %59 = vset.pattern.permute.xlu0 0
    %60 = vperm.xlu0 %59, %v42
    %v61 = vpop.permute.xlu0 %60
    %v65 = vcombine.high %v33, %v33
    %vm66 = vcmask 31744
    %v68 = vsel %vm66, %v35, 0
    %v71 = vsel %vm66, %v36, 0
    %v74 = vsel %vm66, %v37, 0
    %v77 = vsel %vm66, %v38, 0
    %vm79 = vcmask 1043456
    %v80 = vsel %vm79, %v33, 0
    %v82 = vsel %vm79, %v65, 0
    %v84 = vsel %vm79, %v34, 0
    %86 = vmatprep.subr.mxu0 %v82
    %87 = vmatpush1.msra.mxu0 %v80
    %88 = vmatprep.subr.mxu0 0.0
    %89 = vmatpush1.msra.mxu0 0.0
    %90 = vmatprep.subr.mxu0 0.0
    %91 = vmatpush1.msra.mxu0 0.0
    %92 = vmatprep.subr.mxu0 0.0
    %93 = vmatpush1.msra.mxu0 0.0
    %94 = vmatprep.subr.mxu0 0.0
    %95 = vmatpush1.msra.mxu0 0.0
    %96 = vmatprep.subr.mxu0 0.0
    %97 = vmatpush1.msra.mxu0 0.0
    %98 = vmatprep.subr.mxu0 0.0
    %99 = vmatpush1.msra.mxu0 0.0
    %100 = vmatprep.subr.mxu0 0.0
    %101 = vmatpush1.msra.mxu0 0.0
    %102 = vmatprep.subr.mxu0 0.0
    %103 = vmatpush1.msra.mxu0 0.0
    %104 = vmatprep.subr.mxu0 0.0
    %105 = vmatpush1.msra.mxu0 0.0
    %106 = vmatprep.subr.mxu0 0.0
    %107 = vmatpush1.msra.mxu0 0.0
    %108 = vmatprep.subr.mxu0 0.0
    %109 = vmatpush1.msra.mxu0 0.0
    %110 = vmatprep.subr.mxu0 0.0
    %111 = vmatpush1.msra.mxu0 0.0
    %112 = vmatprep.subr.mxu0 0.0
    %113 = vmatpush1.msra.mxu0 0.0
    %114 = vmatprep.subr.mxu0 0.0
    %115 = vmatpush1.msra.mxu0 0.0
    %116 = vmatprep.subr.mxu0 0.0
    %117 = vmatpush1.msra.mxu0 0.0
    %118 = vmatprep.subr.mxu0 0.0
    %119 = vmatpush1.msra.mxu0 0.0
    %120 = vmatprep.subr.mxu0 0.0
    %121 = vmatpush1.msra.mxu0 0.0
    %122 = vmatprep.subr.mxu0 0.0
    %123 = vmatpush1.msra.mxu0 0.0
    %124 = vmatprep.subr.mxu0 0.0
    %125 = vmatpush1.msra.mxu0 0.0
    %126 = vmatprep.subr.mxu0 0.0
    %127 = vmatpush1.msra.mxu0 0.0
    %128 = vmatprep.subr.mxu0 0.0
    %129 = vmatpush1.msra.mxu0 0.0
    %130 = vmatprep.subr.mxu0 0.0
    %131 = vmatpush1.msra.mxu0 0.0
    %132 = vmatprep.subr.mxu0 0.0
    %133 = vmatpush1.msra.mxu0 0.0
    %134 = vmatprep.subr.mxu0 0.0
    %135 = vmatpush1.msra.mxu0 0.0
    %136 = vmatprep.subr.mxu0 0.0
    %137 = vmatpush1.msra.mxu0 0.0
    %138 = vmatprep.subr.mxu0 0.0
    %139 = vmatpush1.msra.mxu0 0.0
    %140 = vmatprep.subr.mxu0 0.0
    %141 = vmatpush1.msra.mxu0 0.0
    %142 = vmatprep.subr.mxu0 0.0
    %143 = vmatpush1.msra.mxu0 0.0
    %144 = vmatprep.subr.mxu0 0.0
    %145 = vmatpush1.msra.mxu0 0.0
    %146 = vmatprep.subr.mxu0 0.0
    %147 = vmatpush1.msra.mxu0 0.0
    %148 = vmatprep.subr.mxu0 0.0
    %149 = vmatpush1.msra.mxu0 0.0
    %150 = vmatprep.mubr.f32.mxu0 0.0
    %151 = vmatmul.mubr.f32.gmra.mrb[0].mxu0 %v68
    %v152 = vpop.f32.mrb[0].mxu0
    %v153 = vadd.f32 %v46, %v152
    %v154 = vpop.f32.mrb[0].mxu0
    %v155 = vadd.f32 %v46, %v154
    %156 = vmatprep.mubr.f32.mxu0 0.0
    %157 = vmatmul.mubr.f32.gmra.mrb[0].mxu0 %v71
    %v158 = vpop.f32.mrb[0].mxu0
    %v159 = vadd.f32 %v51, %v158
    %v160 = vpop.f32.mrb[0].mxu0
    %v161 = vadd.f32 %v51, %v160
    %162 = vmatprep.mubr.f32.mxu0 0.0
    %163 = vmatmul.mubr.f32.gmra.mrb[0].mxu0 %v74
    %v164 = vpop.f32.mrb[0].mxu0
    %v165 = vadd.f32 %v56, %v164
    %v166 = vpop.f32.mrb[0].mxu0
    %v167 = vadd.f32 %v56, %v166
    %168 = vmatprep.mubr.f32.mxu0 0.0
    %169 = vmatmul.mubr.f32.gmra.mrb[0].mxu0 %v77
    %v170 = vpop.f32.mrb[0].mxu0
    %v171 = vadd.f32 %v61, %v170
    %v172 = vpop.f32.mrb[0].mxu0
    %v173 = vadd.f32 %v61, %v172
    %174 = vdwg.mxu0
    %175 = vmatprep.subr.mxu0 0.0
    %176 = vmatpush1.msra.mxu0 %v84
    %177 = vmatprep.subr.mxu0 0.0
    %178 = vmatpush1.msra.mxu0 0.0
    %179 = vmatprep.subr.mxu0 0.0
    %180 = vmatpush1.msra.mxu0 0.0
    %181 = vmatprep.subr.mxu0 0.0
    %182 = vmatpush1.msra.mxu0 0.0
    %183 = vmatprep.subr.mxu0 0.0
    %184 = vmatpush1.msra.mxu0 0.0
    %185 = vmatprep.subr.mxu0 0.0
    %186 = vmatpush1.msra.mxu0 0.0
    %187 = vmatprep.subr.mxu0 0.0
    %188 = vmatpush1.msra.mxu0 0.0
    %189 = vmatprep.subr.mxu0 0.0
    %190 = vmatpush1.msra.mxu0 0.0
    %191 = vmatprep.subr.mxu0 0.0
    %192 = vmatpush1.msra.mxu0 0.0
    %193 = vmatprep.subr.mxu0 0.0
    %194 = vmatpush1.msra.mxu0 0.0
    %195 = vmatprep.subr.mxu0 0.0
    %196 = vmatpush1.msra.mxu0 0.0
    %197 = vmatprep.subr.mxu0 0.0
    %198 = vmatpush1.msra.mxu0 0.0
    %199 = vmatprep.subr.mxu0 0.0
    %200 = vmatpush1.msra.mxu0 0.0
    %201 = vmatprep.subr.mxu0 0.0
    %202 = vmatpush1.msra.mxu0 0.0
    %203 = vmatprep.subr.mxu0 0.0
    %204 = vmatpush1.msra.mxu0 0.0
    %205 = vmatprep.subr.mxu0 0.0
    %206 = vmatpush1.msra.mxu0 0.0
    %207 = vmatprep.subr.mxu0 0.0
    %208 = vmatpush1.msra.mxu0 0.0
    %209 = vmatprep.subr.mxu0 0.0
    %210 = vmatpush1.msra.mxu0 0.0
    %211 = vmatprep.subr.mxu0 0.0
    %212 = vmatpush1.msra.mxu0 0.0
    %213 = vmatprep.subr.mxu0 0.0
    %214 = vmatpush1.msra.mxu0 0.0
    %215 = vmatprep.subr.mxu0 0.0
    %216 = vmatpush1.msra.mxu0 0.0
    %217 = vmatprep.subr.mxu0 0.0
    %218 = vmatpush1.msra.mxu0 0.0
    %219 = vmatprep.subr.mxu0 0.0
    %220 = vmatpush1.msra.mxu0 0.0
    %221 = vmatprep.subr.mxu0 0.0
    %222 = vmatpush1.msra.mxu0 0.0
    %223 = vmatprep.subr.mxu0 0.0
    %224 = vmatpush1.msra.mxu0 0.0
    %225 = vmatprep.subr.mxu0 0.0
    %226 = vmatpush1.msra.mxu0 0.0
    %227 = vmatprep.subr.mxu0 0.0
    %228 = vmatpush1.msra.mxu0 0.0
    %229 = vmatprep.subr.mxu0 0.0
    %230 = vmatpush1.msra.mxu0 0.0
    %231 = vmatprep.subr.mxu0 0.0
    %232 = vmatpush1.msra.mxu0 0.0
    %233 = vmatprep.subr.mxu0 0.0
    %234 = vmatpush1.msra.mxu0 0.0
    %235 = vmatprep.subr.mxu0 0.0
    %236 = vmatpush1.msra.mxu0 0.0
    %237 = vmatprep.subr.mxu0 0.0
    %238 = vmatpush1.msra.mxu0 0.0
    %239 = vmatprep.mubr.f32.mxu0 0.0
    %240 = vmatmul.mubr.f32.gmra.mrb[0].mxu0 %v68
    %v241 = vpop.f32.mrb[0].mxu0
    %v242 = vadd.f32 %v46, %v241
    %v243 = vpop.f32.mrb[0].mxu0
    %244 = vmatprep.mubr.f32.mxu0 0.0
    %245 = vmatmul.mubr.f32.gmra.mrb[0].mxu0 %v71
    %v246 = vpop.f32.mrb[0].mxu0
    %v247 = vadd.f32 %v51, %v246
    %v248 = vpop.f32.mrb[0].mxu0
    %249 = vmatprep.mubr.f32.mxu0 0.0
    %250 = vmatmul.mubr.f32.gmra.mrb[0].mxu0 %v74
    %v251 = vpop.f32.mrb[0].mxu0
    %v252 = vadd.f32 %v56, %v251
    %v253 = vpop.f32.mrb[0].mxu0
    %254 = vmatprep.mubr.f32.mxu0 0.0
    %255 = vmatmul.mubr.f32.gmra.mrb[0].mxu0 %v77
    %v256 = vpop.f32.mrb[0].mxu0
    %v257 = vadd.f32 %v61, %v256
    %v258 = vpop.f32.mrb[0].mxu0
    %259 = vdwg.mxu0
    %v260 = vtanh.pop %v153
    %v261 = vtanh.pop %v155
    %v262 = vtanh.pop %v242
    %v263 = vtanh.pop %v159
    %v264 = vtanh.pop %v161
    %v265 = vtanh.pop %v247
    %v266 = vtanh.pop %v165
    %v267 = vtanh.pop %v167
    %v268 = vtanh.pop %v252
    %v269 = vtanh.pop %v171
    %v270 = vtanh.pop %v173
    %v271 = vtanh.pop %v257
    %v272 = vld [vmem:[%s3] sm:$0xff]
    %v273 = vld [vmem:[%s3 + $0x8] sm:$0xff]
    %v274 = vld [vmem:[%s3 + $0x10] sm:$0xff]
    %v275 = vld [vmem:[%s3 + $0x18] sm:$0xff]
    %v276 = vld [vmem:[%s4] sm:$0xff]
    %v277 = vld [vmem:[%s4 + $0x8] sm:$0xff]
    %v278 = vld [vmem:[%s4 + $0x10] sm:$0xff]
    %v279 = vld [vmem:[%s4 + $0x18] sm:$0xff]
    %281 = vset.pattern.permute.xlu0 0
    %282 = vperm.xlu0 %281, %v276
    %v283 = vpop.permute.xlu0 %282
    %286 = vset.pattern.permute.xlu0 0
    %287 = vperm.xlu0 %286, %v277
    %v288 = vpop.permute.xlu0 %287
    %291 = vset.pattern.permute.xlu0 0
    %292 = vperm.xlu0 %291, %v278
    %v293 = vpop.permute.xlu0 %292
    %296 = vset.pattern.permute.xlu0 0
    %297 = vperm.xlu0 %296, %v279
    %v298 = vpop.permute.xlu0 %297
    %vm300 = vcmask 261120
    %v302 = vsel %vm300, %v272, 0
    %v305 = vsel %vm300, %v273, 0
    %v308 = vsel %vm300, %v274, 0
    %v311 = vsel %vm300, %v275, 0
    %313 = vmatprep.subr.mxu0 %v261
    %314 = vmatpush1.msra.mxu0 %v260
    %315 = vmatprep.subr.mxu0 %v264
    %316 = vmatpush1.msra.mxu0 %v263
    %317 = vmatprep.subr.mxu0 %v267
    %318 = vmatpush1.msra.mxu0 %v266
    %319 = vmatprep.subr.mxu0 %v270
    %320 = vmatpush1.msra.mxu0 %v269
    %321 = vmatprep.subr.mxu0 0.0
    %322 = vmatpush1.msra.mxu0 0.0
    %323 = vmatprep.subr.mxu0 0.0
    %324 = vmatpush1.msra.mxu0 0.0
    %325 = vmatprep.subr.mxu0 0.0
    %326 = vmatpush1.msra.mxu0 0.0
    %327 = vmatprep.subr.mxu0 0.0
    %328 = vmatpush1.msra.mxu0 0.0
    %329 = vmatprep.subr.mxu0 0.0
    %330 = vmatpush1.msra.mxu0 0.0
    %331 = vmatprep.subr.mxu0 0.0
    %332 = vmatpush1.msra.mxu0 0.0
    %333 = vmatprep.subr.mxu0 0.0
    %334 = vmatpush1.msra.mxu0 0.0
    %335 = vmatprep.subr.mxu0 0.0
    %336 = vmatpush1.msra.mxu0 0.0
    %337 = vmatprep.subr.mxu0 0.0
    %338 = vmatpush1.msra.mxu0 0.0
    %339 = vmatprep.subr.mxu0 0.0
    %340 = vmatpush1.msra.mxu0 0.0
    %341 = vmatprep.subr.mxu0 0.0
    %342 = vmatpush1.msra.mxu0 0.0
    %343 = vmatprep.subr.mxu0 0.0
    %344 = vmatpush1.msra.mxu0 0.0
    %345 = vmatprep.subr.mxu0 0.0
    %346 = vmatpush1.msra.mxu0 0.0
    %347 = vmatprep.subr.mxu0 0.0
    %348 = vmatpush1.msra.mxu0 0.0
    %349 = vmatprep.subr.mxu0 0.0
    %350 = vmatpush1.msra.mxu0 0.0
    %351 = vmatprep.subr.mxu0 0.0
    %352 = vmatpush1.msra.mxu0 0.0
    %353 = vmatprep.subr.mxu0 0.0
    %354 = vmatpush1.msra.mxu0 0.0
    %355 = vmatprep.subr.mxu0 0.0
    %356 = vmatpush1.msra.mxu0 0.0
    %357 = vmatprep.subr.mxu0 0.0
    %358 = vmatpush1.msra.mxu0 0.0
    %359 = vmatprep.subr.mxu0 0.0
    %360 = vmatpush1.msra.mxu0 0.0
    %361 = vmatprep.subr.mxu0 0.0
    %362 = vmatpush1.msra.mxu0 0.0
    %363 = vmatprep.subr.mxu0 0.0
    %364 = vmatpush1.msra.mxu0 0.0
    %365 = vmatprep.subr.mxu0 0.0
    %366 = vmatpush1.msra.mxu0 0.0
    %367 = vmatprep.subr.mxu0 0.0
    %368 = vmatpush1.msra.mxu0 0.0
    %369 = vmatprep.subr.mxu0 0.0
    %370 = vmatpush1.msra.mxu0 0.0
    %371 = vmatprep.subr.mxu0 0.0
    %372 = vmatpush1.msra.mxu0 0.0
    %373 = vmatprep.subr.mxu0 0.0
    %374 = vmatpush1.msra.mxu0 0.0
    %375 = vmatprep.subr.mxu0 0.0
    %376 = vmatpush1.msra.mxu0 0.0
    %377 = vmatprep.mubr.f32.mxu0 0.0
    %378 = vmatmul.mubr.f32.gmra.mrb[0].mxu0 %v302
    %v379 = vpop.f32.mrb[0].mxu0
    %v380 = vadd.f32 %v283, %v379
    %v381 = vpop.f32.mrb[0].mxu0
    %v382 = vadd.f32 %v283, %v381
    %383 = vmatprep.mubr.f32.mxu0 0.0
    %384 = vmatmul.mubr.f32.gmra.mrb[0].mxu0 %v305
    %v385 = vpop.f32.mrb[0].mxu0
    %v386 = vadd.f32 %v288, %v385
    %v387 = vpop.f32.mrb[0].mxu0
    %v388 = vadd.f32 %v288, %v387
    %389 = vmatprep.mubr.f32.mxu0 0.0
    %390 = vmatmul.mubr.f32.gmra.mrb[0].mxu0 %v308
    %v391 = vpop.f32.mrb[0].mxu0
    %v392 = vadd.f32 %v293, %v391
    %v393 = vpop.f32.mrb[0].mxu0
    %v394 = vadd.f32 %v293, %v393
    %395 = vmatprep.mubr.f32.mxu0 0.0
    %396 = vmatmul.mubr.f32.gmra.mrb[0].mxu0 %v311
    %v397 = vpop.f32.mrb[0].mxu0
    %v398 = vadd.f32 %v298, %v397
    %v399 = vpop.f32.mrb[0].mxu0
    %v400 = vadd.f32 %v298, %v399
    %401 = vdwg.mxu0
    %402 = vmatprep.subr.mxu0 0.0
    %403 = vmatpush1.msra.mxu0 %v262
    %404 = vmatprep.subr.mxu0 0.0
    %405 = vmatpush1.msra.mxu0 %v265
    %406 = vmatprep.subr.mxu0 0.0
    %407 = vmatpush1.msra.mxu0 %v268
    %408 = vmatprep.subr.mxu0 0.0
    %409 = vmatpush1.msra.mxu0 %v271
    %410 = vmatprep.subr.mxu0 0.0
    %411 = vmatpush1.msra.mxu0 0.0
    %412 = vmatprep.subr.mxu0 0.0
    %413 = vmatpush1.msra.mxu0 0.0
    %414 = vmatprep.subr.mxu0 0.0
    %415 = vmatpush1.msra.mxu0 0.0
    %416 = vmatprep.subr.mxu0 0.0
    %417 = vmatpush1.msra.mxu0 0.0
    %418 = vmatprep.subr.mxu0 0.0
    %419 = vmatpush1.msra.mxu0 0.0
    %420 = vmatprep.subr.mxu0 0.0
    %421 = vmatpush1.msra.mxu0 0.0
    %422 = vmatprep.subr.mxu0 0.0
    %423 = vmatpush1.msra.mxu0 0.0
    %424 = vmatprep.subr.mxu0 0.0
    %425 = vmatpush1.msra.mxu0 0.0
    %426 = vmatprep.subr.mxu0 0.0
    %427 = vmatpush1.msra.mxu0 0.0
    %428 = vmatprep.subr.mxu0 0.0
    %429 = vmatpush1.msra.mxu0 0.0
    %430 = vmatprep.subr.mxu0 0.0
    %431 = vmatpush1.msra.mxu0 0.0
    %432 = vmatprep.subr.mxu0 0.0
    %433 = vmatpush1.msra.mxu0 0.0
    %434 = vmatprep.subr.mxu0 0.0
    %435 = vmatpush1.msra.mxu0 0.0
    %436 = vmatprep.subr.mxu0 0.0
    %437 = vmatpush1.msra.mxu0 0.0
    %438 = vmatprep.subr.mxu0 0.0
    %439 = vmatpush1.msra.mxu0 0.0
    %440 = vmatprep.subr.mxu0 0.0
    %441 = vmatpush1.msra.mxu0 0.0
    %442 = vmatprep.subr.mxu0 0.0
    %443 = vmatpush1.msra.mxu0 0.0
    %444 = vmatprep.subr.mxu0 0.0
    %445 = vmatpush1.msra.mxu0 0.0
    %446 = vmatprep.subr.mxu0 0.0
    %447 = vmatpush1.msra.mxu0 0.0
    %448 = vmatprep.subr.mxu0 0.0
    %449 = vmatpush1.msra.mxu0 0.0
    %450 = vmatprep.subr.mxu0 0.0
    %451 = vmatpush1.msra.mxu0 0.0
    %452 = vmatprep.subr.mxu0 0.0
    %453 = vmatpush1.msra.mxu0 0.0
    %454 = vmatprep.subr.mxu0 0.0
    %455 = vmatpush1.msra.mxu0 0.0
    %456 = vmatprep.subr.mxu0 0.0
    %457 = vmatpush1.msra.mxu0 0.0
    %458 = vmatprep.subr.mxu0 0.0
    %459 = vmatpush1.msra.mxu0 0.0
    %460 = vmatprep.subr.mxu0 0.0
    %461 = vmatpush1.msra.mxu0 0.0
    %462 = vmatprep.subr.mxu0 0.0
    %463 = vmatpush1.msra.mxu0 0.0
    %464 = vmatprep.subr.mxu0 0.0
    %465 = vmatpush1.msra.mxu0 0.0
    %466 = vmatprep.mubr.f32.mxu0 0.0
    %467 = vmatmul.mubr.f32.gmra.mrb[0].mxu0 %v302
    %v468 = vpop.f32.mrb[0].mxu0
    %v469 = vadd.f32 %v283, %v468
    %v470 = vpop.f32.mrb[0].mxu0
    %471 = vmatprep.mubr.f32.mxu0 0.0
    %472 = vmatmul.mubr.f32.gmra.mrb[0].mxu0 %v305
    %v473 = vpop.f32.mrb[0].mxu0
    %v474 = vadd.f32 %v288, %v473
    %v475 = vpop.f32.mrb[0].mxu0
    %476 = vmatprep.mubr.f32.mxu0 0.0
    %477 = vmatmul.mubr.f32.gmra.mrb[0].mxu0 %v308
    %v478 = vpop.f32.mrb[0].mxu0
    %v479 = vadd.f32 %v293, %v478
    %v480 = vpop.f32.mrb[0].mxu0
    %481 = vmatprep.mubr.f32.mxu0 0.0
    %482 = vmatmul.mubr.f32.gmra.mrb[0].mxu0 %v311
    %v483 = vpop.f32.mrb[0].mxu0
    %v484 = vadd.f32 %v298, %v483
    %v485 = vpop.f32.mrb[0].mxu0
    %486 = vdwg.mxu0
    %v487 = vtanh.pop %v380
    %v488 = vtanh.pop %v382
    %v489 = vtanh.pop %v469
    %v490 = vtanh.pop %v386
    %v491 = vtanh.pop %v388
    %v492 = vtanh.pop %v474
    %v493 = vtanh.pop %v392
    %v494 = vtanh.pop %v394
    %v495 = vtanh.pop %v479
    %v496 = vtanh.pop %v398
    %v497 = vtanh.pop %v400
    %v498 = vtanh.pop %v484
    %v499 = vld [vmem:[%s5] sm:$0xff]
    %v500 = vld [vmem:[%s5 + $0x8] sm:$0xff]
    %v501 = vld [vmem:[%s5 + $0x10] sm:$0xff]
    %v502 = vld [vmem:[%s5 + $0x18] sm:$0xff]
    %v503 = vld [vmem:[%s6] sm:$0xff]
    %v504 = vld [vmem:[%s6 + $0x8] sm:$0xff]
    %v505 = vld [vmem:[%s6 + $0x10] sm:$0xff]
    %v506 = vld [vmem:[%s6 + $0x18] sm:$0xff]
    %508 = vset.pattern.permute.xlu0 0
    %509 = vperm.xlu0 %508, %v503
    %v510 = vpop.permute.xlu0 %509
    %513 = vset.pattern.permute.xlu0 0
    %514 = vperm.xlu0 %513, %v504
    %v515 = vpop.permute.xlu0 %514
    %518 = vset.pattern.permute.xlu0 0
    %519 = vperm.xlu0 %518, %v505
    %v520 = vpop.permute.xlu0 %519
    %523 = vset.pattern.permute.xlu0 0
    %524 = vperm.xlu0 %523, %v506
    %v525 = vpop.permute.xlu0 %524
    %v528 = vsel %vm300, %v499, 0
    %v531 = vsel %vm300, %v500, 0
    %v534 = vsel %vm300, %v501, 0
    %v537 = vsel %vm300, %v502, 0
    %539 = vmatprep.subr.mxu0 %v488
    %540 = vmatpush1.msra.mxu0 %v487
    %541 = vmatprep.subr.mxu0 %v491
    %542 = vmatpush1.msra.mxu0 %v490
    %543 = vmatprep.subr.mxu0 %v494
    %544 = vmatpush1.msra.mxu0 %v493
    %545 = vmatprep.subr.mxu0 %v497
    %546 = vmatpush1.msra.mxu0 %v496
    %547 = vmatprep.subr.mxu0 0.0
    %548 = vmatpush1.msra.mxu0 0.0
    %549 = vmatprep.subr.mxu0 0.0
    %550 = vmatpush1.msra.mxu0 0.0
    %551 = vmatprep.subr.mxu0 0.0
    %552 = vmatpush1.msra.mxu0 0.0
    %553 = vmatprep.subr.mxu0 0.0
    %554 = vmatpush1.msra.mxu0 0.0
    %555 = vmatprep.subr.mxu0 0.0
    %556 = vmatpush1.msra.mxu0 0.0
    %557 = vmatprep.subr.mxu0 0.0
    %558 = vmatpush1.msra.mxu0 0.0
    %559 = vmatprep.subr.mxu0 0.0
    %560 = vmatpush1.msra.mxu0 0.0
    %561 = vmatprep.subr.mxu0 0.0
    %562 = vmatpush1.msra.mxu0 0.0
    %563 = vmatprep.subr.mxu0 0.0
    %564 = vmatpush1.msra.mxu0 0.0
    %565 = vmatprep.subr.mxu0 0.0
    %566 = vmatpush1.msra.mxu0 0.0
    %567 = vmatprep.subr.mxu0 0.0
    %568 = vmatpush1.msra.mxu0 0.0
    %569 = vmatprep.subr.mxu0 0.0
    %570 = vmatpush1.msra.mxu0 0.0
    %571 = vmatprep.subr.mxu0 0.0
    %572 = vmatpush1.msra.mxu0 0.0
    %573 = vmatprep.subr.mxu0 0.0
    %574 = vmatpush1.msra.mxu0 0.0
    %575 = vmatprep.subr.mxu0 0.0
    %576 = vmatpush1.msra.mxu0 0.0
    %577 = vmatprep.subr.mxu0 0.0
    %578 = vmatpush1.msra.mxu0 0.0
    %579 = vmatprep.subr.mxu0 0.0
    %580 = vmatpush1.msra.mxu0 0.0
    %581 = vmatprep.subr.mxu0 0.0
    %582 = vmatpush1.msra.mxu0 0.0
    %583 = vmatprep.subr.mxu0 0.0
    %584 = vmatpush1.msra.mxu0 0.0
    %585 = vmatprep.subr.mxu0 0.0
    %586 = vmatpush1.msra.mxu0 0.0
    %587 = vmatprep.subr.mxu0 0.0
    %588 = vmatpush1.msra.mxu0 0.0
    %589 = vmatprep.subr.mxu0 0.0
    %590 = vmatpush1.msra.mxu0 0.0
    %591 = vmatprep.subr.mxu0 0.0
    %592 = vmatpush1.msra.mxu0 0.0
    %593 = vmatprep.subr.mxu0 0.0
    %594 = vmatpush1.msra.mxu0 0.0
    %595 = vmatprep.subr.mxu0 0.0
    %596 = vmatpush1.msra.mxu0 0.0
    %597 = vmatprep.subr.mxu0 0.0
    %598 = vmatpush1.msra.mxu0 0.0
    %599 = vmatprep.subr.mxu0 0.0
    %600 = vmatpush1.msra.mxu0 0.0
    %601 = vmatprep.subr.mxu0 0.0
    %602 = vmatpush1.msra.mxu0 0.0
    %603 = vmatprep.mubr.f32.mxu0 0.0
    %604 = vmatmul.mubr.f32.gmra.mrb[0].mxu0 %v528
    %v605 = vpop.f32.mrb[0].mxu0
    %v606 = vadd.f32 %v510, %v605
    %v607 = vpop.f32.mrb[0].mxu0
    %v608 = vadd.f32 %v510, %v607
    %609 = vmatprep.mubr.f32.mxu0 0.0
    %610 = vmatmul.mubr.f32.gmra.mrb[0].mxu0 %v531
    %v611 = vpop.f32.mrb[0].mxu0
    %v612 = vadd.f32 %v515, %v611
    %v613 = vpop.f32.mrb[0].mxu0
    %v614 = vadd.f32 %v515, %v613
    %615 = vmatprep.mubr.f32.mxu0 0.0
    %616 = vmatmul.mubr.f32.gmra.mrb[0].mxu0 %v534
    %v617 = vpop.f32.mrb[0].mxu0
    %v618 = vadd.f32 %v520, %v617
    %v619 = vpop.f32.mrb[0].mxu0
    %v620 = vadd.f32 %v520, %v619
    %621 = vmatprep.mubr.f32.mxu0 0.0
    %622 = vmatmul.mubr.f32.gmra.mrb[0].mxu0 %v537
    %v623 = vpop.f32.mrb[0].mxu0
    %v624 = vadd.f32 %v525, %v623
    %v625 = vpop.f32.mrb[0].mxu0
    %v626 = vadd.f32 %v525, %v625
    %627 = vdwg.mxu0
    %628 = vmatprep.subr.mxu0 0.0
    %629 = vmatpush1.msra.mxu0 %v489
    %630 = vmatprep.subr.mxu0 0.0
    %631 = vmatpush1.msra.mxu0 %v492
    %632 = vmatprep.subr.mxu0 0.0
    %633 = vmatpush1.msra.mxu0 %v495
    %634 = vmatprep.subr.mxu0 0.0
    %635 = vmatpush1.msra.mxu0 %v498
    %636 = vmatprep.subr.mxu0 0.0
    %637 = vmatpush1.msra.mxu0 0.0
    %638 = vmatprep.subr.mxu0 0.0
    %639 = vmatpush1.msra.mxu0 0.0
    %640 = vmatprep.subr.mxu0 0.0
    %641 = vmatpush1.msra.mxu0 0.0
    %642 = vmatprep.subr.mxu0 0.0
    %643 = vmatpush1.msra.mxu0 0.0
    %644 = vmatprep.subr.mxu0 0.0
    %645 = vmatpush1.msra.mxu0 0.0
    %646 = vmatprep.subr.mxu0 0.0
    %647 = vmatpush1.msra.mxu0 0.0
    %648 = vmatprep.subr.mxu0 0.0
    %649 = vmatpush1.msra.mxu0 0.0
    %650 = vmatprep.subr.mxu0 0.0
    %651 = vmatpush1.msra.mxu0 0.0
    %652 = vmatprep.subr.mxu0 0.0
    %653 = vmatpush1.msra.mxu0 0.0
    %654 = vmatprep.subr.mxu0 0.0
    %655 = vmatpush1.msra.mxu0 0.0
    %656 = vmatprep.subr.mxu0 0.0
    %657 = vmatpush1.msra.mxu0 0.0
    %658 = vmatprep.subr.mxu0 0.0
    %659 = vmatpush1.msra.mxu0 0.0
    %660 = vmatprep.subr.mxu0 0.0
    %661 = vmatpush1.msra.mxu0 0.0
    %662 = vmatprep.subr.mxu0 0.0
    %663 = vmatpush1.msra.mxu0 0.0
    %664 = vmatprep.subr.mxu0 0.0
    %665 = vmatpush1.msra.mxu0 0.0
    %666 = vmatprep.subr.mxu0 0.0
    %667 = vmatpush1.msra.mxu0 0.0
    %668 = vmatprep.subr.mxu0 0.0
    %669 = vmatpush1.msra.mxu0 0.0
    %670 = vmatprep.subr.mxu0 0.0
    %671 = vmatpush1.msra.mxu0 0.0
    %672 = vmatprep.subr.mxu0 0.0
    %673 = vmatpush1.msra.mxu0 0.0
    %674 = vmatprep.subr.mxu0 0.0
    %675 = vmatpush1.msra.mxu0 0.0
    %676 = vmatprep.subr.mxu0 0.0
    %677 = vmatpush1.msra.mxu0 0.0
    %678 = vmatprep.subr.mxu0 0.0
    %679 = vmatpush1.msra.mxu0 0.0
    %680 = vmatprep.subr.mxu0 0.0
    %681 = vmatpush1.msra.mxu0 0.0
    %682 = vmatprep.subr.mxu0 0.0
    %683 = vmatpush1.msra.mxu0 0.0
    %684 = vmatprep.subr.mxu0 0.0
    %685 = vmatpush1.msra.mxu0 0.0
    %686 = vmatprep.subr.mxu0 0.0
    %687 = vmatpush1.msra.mxu0 0.0
    %688 = vmatprep.subr.mxu0 0.0
    %689 = vmatpush1.msra.mxu0 0.0
    %690 = vmatprep.subr.mxu0 0.0
    %691 = vmatpush1.msra.mxu0 0.0
    %692 = vmatprep.mubr.f32.mxu0 0.0
    %693 = vmatmul.mubr.f32.gmra.mrb[0].mxu0 %v528
    %v694 = vpop.f32.mrb[0].mxu0
    %v695 = vadd.f32 %v510, %v694
    %v696 = vpop.f32.mrb[0].mxu0
    %697 = vmatprep.mubr.f32.mxu0 0.0
    %698 = vmatmul.mubr.f32.gmra.mrb[0].mxu0 %v531
    %v699 = vpop.f32.mrb[0].mxu0
    %v700 = vadd.f32 %v515, %v699
    %v701 = vpop.f32.mrb[0].mxu0
    %702 = vmatprep.mubr.f32.mxu0 0.0
    %703 = vmatmul.mubr.f32.gmra.mrb[0].mxu0 %v534
    %v704 = vpop.f32.mrb[0].mxu0
    %v705 = vadd.f32 %v520, %v704
    %v706 = vpop.f32.mrb[0].mxu0
    %707 = vmatprep.mubr.f32.mxu0 0.0
    %708 = vmatmul.mubr.f32.gmra.mrb[0].mxu0 %v537
    %v709 = vpop.f32.mrb[0].mxu0
    %v710 = vadd.f32 %v525, %v709
    %v711 = vpop.f32.mrb[0].mxu0
    %712 = vdwg.mxu0
    %v713 = vtanh.pop %v606
    %v714 = vtanh.pop %v608
    %v715 = vtanh.pop %v695
    %v716 = vtanh.pop %v612
    %v717 = vtanh.pop %v614
    %v718 = vtanh.pop %v700
    %v719 = vtanh.pop %v618
    %v720 = vtanh.pop %v620
    %v721 = vtanh.pop %v705
    %v722 = vtanh.pop %v624
    %v723 = vtanh.pop %v626
    %v724 = vtanh.pop %v710
    %v725 = vld [vmem:[%s7] sm:$0x3]
    %v726 = vld [vmem:[%s8] sm:$0x3]
    %728 = vset.pattern.permute.xlu0 0
    %729 = vperm.xlu0 %728, %v726
    %v730 = vpop.permute.xlu0 %729
    %v733 = vsel %vm300, %v725, 0
    %735 = vmatprep.subr.mxu0 %v714
    %736 = vmatpush1.msra.mxu0 %v713
    %737 = vmatprep.subr.mxu0 %v717
    %738 = vmatpush1.msra.mxu0 %v716
    %739 = vmatprep.subr.mxu0 %v720
    %740 = vmatpush1.msra.mxu0 %v719
    %741 = vmatprep.subr.mxu0 %v723
    %742 = vmatpush1.msra.mxu0 %v722
    %743 = vmatprep.subr.mxu0 0.0
    %744 = vmatpush1.msra.mxu0 0.0
    %745 = vmatprep.subr.mxu0 0.0
    %746 = vmatpush1.msra.mxu0 0.0
    %747 = vmatprep.subr.mxu0 0.0
    %748 = vmatpush1.msra.mxu0 0.0
    %749 = vmatprep.subr.mxu0 0.0
    %750 = vmatpush1.msra.mxu0 0.0
    %751 = vmatprep.subr.mxu0 0.0
    %752 = vmatpush1.msra.mxu0 0.0
    %753 = vmatprep.subr.mxu0 0.0
    %754 = vmatpush1.msra.mxu0 0.0
    %755 = vmatprep.subr.mxu0 0.0
    %756 = vmatpush1.msra.mxu0 0.0
    %757 = vmatprep.subr.mxu0 0.0
    %758 = vmatpush1.msra.mxu0 0.0
    %759 = vmatprep.subr.mxu0 0.0
    %760 = vmatpush1.msra.mxu0 0.0
    %761 = vmatprep.subr.mxu0 0.0
    %762 = vmatpush1.msra.mxu0 0.0
    %763 = vmatprep.subr.mxu0 0.0
    %764 = vmatpush1.msra.mxu0 0.0
    %765 = vmatprep.subr.mxu0 0.0
    %766 = vmatpush1.msra.mxu0 0.0
    %767 = vmatprep.subr.mxu0 0.0
    %768 = vmatpush1.msra.mxu0 0.0
    %769 = vmatprep.subr.mxu0 0.0
    %770 = vmatpush1.msra.mxu0 0.0
    %771 = vmatprep.subr.mxu0 0.0
    %772 = vmatpush1.msra.mxu0 0.0
    %773 = vmatprep.subr.mxu0 0.0
    %774 = vmatpush1.msra.mxu0 0.0
    %775 = vmatprep.subr.mxu0 0.0
    %776 = vmatpush1.msra.mxu0 0.0
    %777 = vmatprep.subr.mxu0 0.0
    %778 = vmatpush1.msra.mxu0 0.0
    %779 = vmatprep.subr.mxu0 0.0
    %780 = vmatpush1.msra.mxu0 0.0
    %781 = vmatprep.subr.mxu0 0.0
    %782 = vmatpush1.msra.mxu0 0.0
    %783 = vmatprep.subr.mxu0 0.0
    %784 = vmatpush1.msra.mxu0 0.0
    %785 = vmatprep.subr.mxu0 0.0
    %786 = vmatpush1.msra.mxu0 0.0
    %787 = vmatprep.subr.mxu0 0.0
    %788 = vmatpush1.msra.mxu0 0.0
    %789 = vmatprep.subr.mxu0 0.0
    %790 = vmatpush1.msra.mxu0 0.0
    %791 = vmatprep.subr.mxu0 0.0
    %792 = vmatpush1.msra.mxu0 0.0
    %793 = vmatprep.subr.mxu0 0.0
    %794 = vmatpush1.msra.mxu0 0.0
    %795 = vmatprep.subr.mxu0 0.0
    %796 = vmatpush1.msra.mxu0 0.0
    %797 = vmatprep.subr.mxu0 0.0
    %798 = vmatpush1.msra.mxu0 0.0
    %799 = vmatprep.mubr.f32.mxu0 0.0
    %800 = vmatmul.mubr.f32.gmra.mrb[0].mxu0 %v733
    %v801 = vpop.f32.mrb[0].mxu0
    %v802 = vadd.f32 %v730, %v801
    %v803 = vpop.f32.mrb[0].mxu0
    %v804 = vadd.f32 %v730, %v803
    %805 = vdwg.mxu0
    %806 = vmatprep.subr.mxu0 0.0
    %807 = vmatpush1.msra.mxu0 %v715
    %808 = vmatprep.subr.mxu0 0.0
    %809 = vmatpush1.msra.mxu0 %v718
    %810 = vmatprep.subr.mxu0 0.0
    %811 = vmatpush1.msra.mxu0 %v721
    %812 = vmatprep.subr.mxu0 0.0
    %813 = vmatpush1.msra.mxu0 %v724
    %814 = vmatprep.subr.mxu0 0.0
    %815 = vmatpush1.msra.mxu0 0.0
    %816 = vmatprep.subr.mxu0 0.0
    %817 = vmatpush1.msra.mxu0 0.0
    %818 = vmatprep.subr.mxu0 0.0
    %819 = vmatpush1.msra.mxu0 0.0
    %820 = vmatprep.subr.mxu0 0.0
    %821 = vmatpush1.msra.mxu0 0.0
    %822 = vmatprep.subr.mxu0 0.0
    %823 = vmatpush1.msra.mxu0 0.0
    %824 = vmatprep.subr.mxu0 0.0
    %825 = vmatpush1.msra.mxu0 0.0
    %826 = vmatprep.subr.mxu0 0.0
    %827 = vmatpush1.msra.mxu0 0.0
    %828 = vmatprep.subr.mxu0 0.0
    %829 = vmatpush1.msra.mxu0 0.0
    %830 = vmatprep.subr.mxu0 0.0
    %831 = vmatpush1.msra.mxu0 0.0
    %832 = vmatprep.subr.mxu0 0.0
    %833 = vmatpush1.msra.mxu0 0.0
    %834 = vmatprep.subr.mxu0 0.0
    %835 = vmatpush1.msra.mxu0 0.0
    %836 = vmatprep.subr.mxu0 0.0
    %837 = vmatpush1.msra.mxu0 0.0
    %838 = vmatprep.subr.mxu0 0.0
    %839 = vmatpush1.msra.mxu0 0.0
    %840 = vmatprep.subr.mxu0 0.0
    %841 = vmatpush1.msra.mxu0 0.0
    %842 = vmatprep.subr.mxu0 0.0
    %843 = vmatpush1.msra.mxu0 0.0
    %844 = vmatprep.subr.mxu0 0.0
    %845 = vmatpush1.msra.mxu0 0.0
    %846 = vmatprep.subr.mxu0 0.0
    %847 = vmatpush1.msra.mxu0 0.0
    %848 = vmatprep.subr.mxu0 0.0
    %849 = vmatpush1.msra.mxu0 0.0
    %850 = vmatprep.subr.mxu0 0.0
    %851 = vmatpush1.msra.mxu0 0.0
    %852 = vmatprep.subr.mxu0 0.0
    %853 = vmatpush1.msra.mxu0 0.0
    %854 = vmatprep.subr.mxu0 0.0
    %855 = vmatpush1.msra.mxu0 0.0
    %856 = vmatprep.subr.mxu0 0.0
    %857 = vmatpush1.msra.mxu0 0.0
    %858 = vmatprep.subr.mxu0 0.0
    %859 = vmatpush1.msra.mxu0 0.0
    %860 = vmatprep.subr.mxu0 0.0
    %861 = vmatpush1.msra.mxu0 0.0
    %862 = vmatprep.subr.mxu0 0.0
    %863 = vmatpush1.msra.mxu0 0.0
    %864 = vmatprep.subr.mxu0 0.0
    %865 = vmatpush1.msra.mxu0 0.0
    %866 = vmatprep.subr.mxu0 0.0
    %867 = vmatpush1.msra.mxu0 0.0
    %868 = vmatprep.subr.mxu0 0.0
    %869 = vmatpush1.msra.mxu0 0.0
    %870 = vmatprep.mubr.f32.mxu0 0.0
    %871 = vmatmul.mubr.f32.gmra.mrb[0].mxu0 %v733
    %v872 = vpop.f32.mrb[0].mxu0
    %v873 = vadd.f32 %v730, %v872
    %v874 = vpop.f32.mrb[0].mxu0
    %875 = vdwg.mxu0
    %v879 = vcombine.low %v802, %v804
    %v881 = vunpack.c.l.s4 1983009808
    %v882 = vunpack.c.0.s8 %v881
    %v883 = vlaneseq
    %v884 = vshrl.u32 %v883, 7
    %v885 = vsub.s32 %v882, %v884
    %v886 = vrot.slane %v879, %v885
    %v888 = vunpack.c.l.s4 1983009808
    %v889 = vunpack.c.0.s8 %v888
    %v890 = vlaneseq
    %v891 = vshrl.u32 %v890, 7
    %v892 = vsub.s32 %v889, %v891
    %v893 = vrot.slane %v873, %v892
    %v894 = vcombine.low %v886, %v893
    %896 = vst [vmem:[#allocation2] sm:$0x3f] %v894
    // Predicated region
    $region38: #{mlp_forward.1} parent=1 // pred_check
      _
    $region39: #{mlp_forward.1} parent=1 // pred_check_branch
      %898 = sbr.rel (0) target = $region41
    $region40: #{mlp_forward.1} parent=1 // pred_region
      %s900 = ssub.s32 96, 96
      %901 = vsyncadd [#allocation3], %s900
      %s903 = sshll.u32 [#allocation2], 4
      %s904 = int_to_ptr.vmem [resolvable:$true] %s903
      %906 = dma.vmem_to_hbm [thread:$0]  %s904, 96, %s9, [#allocation3]
    $region41: #{mlp_forward.1} parent=1 // pred_fallthru
      _
    // Predicated region
    $region42: #{mlp_forward.1} parent=1 // pred_check
      _
    $region43: #{mlp_forward.1} parent=1 // pred_check_branch
      %908 = sbr.rel (0) target = $region45
    $region44: #{mlp_forward.1} parent=1 // pred_region
      %909 = dma.done [#allocation3], 96
    $region45: #{mlp_forward.1} parent=1 // pred_fallthru
      _
    %910 = vsyncpa [#allocation3], 1

</llo_original>
